<compile_context>
chip_gen: v7x
topology: tpu7x:2x2x1
jax: 0.10.0
libtpu: 0.0.40
codegen_flags: <defaults>
</compile_context>

<pallas_src>
import functools

import jax
import jax.numpy as jnp
from jax.experimental import pallas as pl
from jax.experimental.pallas import tpu as pltpu


def _pool_mlp_kernel(x_ref, w1_ref, b1_ref, w2_ref, b2_ref, o_ref, *, inv_n):
    """One batch tile: sum over instances -> scale -> Linear+ReLU -> Linear+Sigmoid.

    x_ref : (TB, NP, FP)   instances (lane-packed: FP == 128 when F == 64)
    w1_ref: (FP, H1)       (lane-packed weights = W1 stacked on itself)
    b1_ref: (1, H1)
    w2_ref: (1, H1)        second layer as a row vector (VPU reduce, no 32x1 MXU op)
    b2_ref: (1, 1) SMEM    scalar bias
    o_ref : (TB, 128)      lane-dense output; column 0 holds the real result
    """
    x = x_ref[...]
    # Sum over the instance axis; accumulate in f32 (safe for bf16 inputs too).
    s = jnp.sum(x.astype(jnp.float32), axis=1)                            # (TB, FP)
    # dec[0]: Linear(F -> 32) + ReLU.  mean(x) @ W1 == (sum(x) @ W1) * (1/N)
    h = jnp.dot(s, w1_ref[...], preferred_element_type=jnp.float32)
    h = jnp.maximum(h * inv_n + b1_ref[...], 0.0)                         # (TB, H1)
    # dec[2]: Linear(32 -> 1) + Sigmoid, as broadcast-mul + lane reduction (VPU/XLU).
    z = jnp.sum(h * w2_ref[...], axis=-1, keepdims=True) + b2_ref[0, 0]   # (TB, 1)
    p = jax.nn.sigmoid(z)
    # Lane-dense store (unmasked vst across 128 lanes); wrapper slices column 0.
    o_ref[...] = jnp.broadcast_to(p, o_ref.shape).astype(o_ref.dtype)


def _round_up(x, m):
    return ((x + m - 1) // m) * m


def simpling_pooling_forward(x, w1, b1, w2, b2, *, pool="mean",
                             max_block_b=512,
                             x_vmem_budget_bytes=16 * 1024 * 1024):
    """Forward pass of simpling_pooling (pool in {'mean','sum'}, reg=False)."""
    if pool not in ("mean", "sum"):
        # TODO(synk): max/min pooling need a different in-kernel reduction (and break the
        # lane-packing trick); module default is 'mean', so only 'mean'/'sum' are implemented.
        raise NotImplementedError("only 'mean' and 'sum' pooling are implemented")

    B, N, F = x.shape
    H1 = w1.shape[1]
    inv_n = (1.0 / float(N)) if pool == "mean" else 1.0

    # --- Lane packing: F == 64 only fills half of each 128-wide vreg row.  Pack two
    # instances per row and stack W1 so that sum(x_packed) @ W1_stacked == sum(x) @ W1.
    if F == 64:
        n_pad = _round_up(N, 2)
        if n_pad != N:
            # A zero instance row contributes nothing to the sum.
            x = jnp.pad(x, ((0, 0), (0, n_pad - N), (0, 0)))
        x_eff = x.reshape(B, n_pad // 2, 128)
        w1_eff = jnp.concatenate([w1, w1], axis=0)          # (128, H1)
        NP, FP = n_pad // 2, 128
    else:
        x_eff, w1_eff = x, w1
        NP, FP = N, F

    # --- Batch tile: multiple of 8 sublanes, capped so 2 (double-buffer) x tile bytes
    # stays under a conservative VMEM budget (fits default scoped limits incl. v7x).
    itemsize = jnp.dtype(x_eff.dtype).itemsize
    per_row_bytes = NP * max(FP, 128) * itemsize            # lane-padded footprint
    tb = min(max_block_b, _round_up(B, 8))
    while tb > 8 and 2 * tb * per_row_bytes > x_vmem_budget_bytes:
        tb //= 2
    tb = max(tb, 8)
    b_pad = _round_up(B, tb)
    if b_pad != B:
        # Zero batch rows produce finite (discarded) outputs.
        x_eff = jnp.pad(x_eff, ((0, b_pad - B), (0, 0), (0, 0)))

    b1_row = b1.reshape(1, H1).astype(jnp.float32)
    w2_row = w2.reshape(1, H1).astype(jnp.float32)
    b2_s = b2.reshape(1, 1).astype(jnp.float32)

    grid = (b_pad // tb,)
    kernel = functools.partial(_pool_mlp_kernel, inv_n=inv_n)

    out = pl.pallas_call(
        kernel,
        out_shape=jax.ShapeDtypeStruct((b_pad, 128), jnp.float32),
        grid_spec=pltpu.PrefetchScalarGridSpec(
            num_scalar_prefetch=0,
            grid=grid,
            in_specs=[
                pl.BlockSpec((tb, NP, FP), lambda i: (i, 0, 0)),   # x stream (pipelined)
                pl.BlockSpec((FP, H1), lambda i: (0, 0)),          # W1 (constant block)
                pl.BlockSpec((1, H1), lambda i: (0, 0)),           # b1
                pl.BlockSpec((1, H1), lambda i: (0, 0)),           # W2 as a row
                pl.BlockSpec((1, 1), lambda i: (0, 0),
                             memory_space=pltpu.MemorySpace.SMEM),  # b2 scalar
            ],
            out_specs=pl.BlockSpec((tb, 128), lambda i: (i, 0)),
        ),
        compiler_params=pltpu.CompilerParams(
            # Batch tiles are independent -> shard across TensorCores on v7x.
            dimension_semantics=("parallel",),
            vmem_limit_bytes=32 * 1024 * 1024,
        ),
    )(x_eff, w1_eff, b1_row, w2_row, b2_s)

    return out[:B, 0:1]


def _torch_linear_init(key, fan_in, fan_out):
    # Mimic nn.Linear default init: U(-1/sqrt(fan_in), 1/sqrt(fan_in))
    kw, kb = jax.random.split(key)
    bound = 1.0 / jnp.sqrt(jnp.float32(fan_in))
    w = jax.random.uniform(kw, (fan_in, fan_out), jnp.float32, -bound, bound)
    b = jax.random.uniform(kb, (fan_out,), jnp.float32, -bound, bound)
    return w, b


if __name__ == "__main__":
    key = jax.random.PRNGKey(0)
    k_x, k_l1, k_l2 = jax.random.split(key, 3)

    # n_input_features must be 64 for the default (reg=False) dec head.
    B, N, F = 2, 8, 64
    x = jax.random.normal(k_x, (B, N, F), dtype=jnp.float32)

    # dec: Linear(64 -> 32), ReLU, Linear(32 -> 1), Sigmoid
    w1, b1 = _torch_linear_init(k_l1, 64, 32)
    w2, b2 = _torch_linear_init(k_l2, 32, 1)

    out = simpling_pooling_forward(x, w1, b1, w2, b2)
    out = jax.block_until_ready(out)

    # Pure-JAX reference.
    pooled = jnp.mean(x, axis=1)
    ref = jax.nn.sigmoid(jnp.maximum(pooled @ w1 + b1, 0.0) @ w2 + b2)
    assert out.shape == (B, 1)
    assert jnp.allclose(out, ref, atol=1e-5, rtol=1e-5), (out, ref)

    print("KERNEL_OK")
</pallas_src>

<mosaic_0001>
module attributes {stable_mosaic.version = 11 : i64} {
  func.func @_pool_mlp_kernel(%arg0: i32, %arg1: memref<8x4x128xf32, #tpu.memory_space<vmem>>, %arg2: memref<128x32xf32, #tpu.memory_space<vmem>>, %arg3: memref<1x32xf32, #tpu.memory_space<vmem>>, %arg4: memref<1x32xf32, #tpu.memory_space<vmem>>, %arg5: memref<1x1xf32, #tpu.memory_space<smem>>, %arg6: memref<8x128xf32, #tpu.memory_space<vmem>>) attributes {dimension_semantics = [#tpu.dimension_semantics<parallel>], iteration_bounds = array<i64: 1>, scalar_prefetch = 0 : i64, scratch_operands = 0 : i64, tpu.core_type = #tpu.core_type<tc>, window_params = [{transform_indices = @transform_0, window_bounds = array<i64: 8, 4, 128>}, {pipeline_mode = #tpu.pipeline_mode<synchronous>, transform_indices = @transform_1, window_bounds = array<i64: 128, 32>}, {pipeline_mode = #tpu.pipeline_mode<synchronous>, transform_indices = @transform_2, window_bounds = array<i64: 1, 32>}, {pipeline_mode = #tpu.pipeline_mode<synchronous>, transform_indices = @transform_3, window_bounds = array<i64: 1, 32>}, {transform_indices = @transform_4, window_bounds = array<i64: 1, 1>}, {transform_indices = @transform_5, window_bounds = array<i64: 8, 128>}]} {
    %c0 = arith.constant 0 : index
    %c0_0 = arith.constant 0 : index
    %c0_1 = arith.constant 0 : index
    %0 = vector.load %arg1[%c0, %c0_0, %c0_1] : memref<8x4x128xf32, #tpu.memory_space<vmem>>, vector<8x4x128xf32>
    %cst = arith.constant dense<0.000000e+00> : vector<8x128xf32>
    %1 = vector.multi_reduction <add>, %0, %cst [1] : vector<8x4x128xf32> to vector<8x128xf32>
    %c0_2 = arith.constant 0 : index
    %c0_3 = arith.constant 0 : index
    %2 = vector.load %arg2[%c0_2, %c0_3] : memref<128x32xf32, #tpu.memory_space<vmem>>, vector<128x32xf32>
    %cst_4 = arith.constant dense<0.000000e+00> : vector<8x32xf32>
    %3 = tpu.matmul %1, %2, %cst_4 {dimension_numbers = #tpu.dot_dimension_numbers<[1], [0], [0], [1], [0, 0, 1, 1], [], []>} : vector<8x128xf32>, vector<128x32xf32>, vector<8x32xf32> -> vector<8x32xf32>
    %cst_5 = arith.constant 1.250000e-01 : f32
    %4 = vector.broadcast %cst_5 : f32 to vector<8x32xf32>
    %5 = arith.mulf %3, %4 : vector<8x32xf32>
    %c0_6 = arith.constant 0 : index
    %c0_7 = arith.constant 0 : index
    %6 = vector.load %arg3[%c0_6, %c0_7] : memref<1x32xf32, #tpu.memory_space<vmem>>, vector<1x32xf32>
    %7 = vector.broadcast %6 : vector<1x32xf32> to vector<8x32xf32>
    %8 = arith.addf %5, %7 : vector<8x32xf32>
    %cst_8 = arith.constant 0.000000e+00 : f32
    %9 = vector.broadcast %cst_8 : f32 to vector<8x32xf32>
    %10 = arith.maximumf %8, %9 : vector<8x32xf32>
    %c0_9 = arith.constant 0 : index
    %c0_10 = arith.constant 0 : index
    %11 = vector.load %arg4[%c0_9, %c0_10] : memref<1x32xf32, #tpu.memory_space<vmem>>, vector<1x32xf32>
    %12 = vector.broadcast %11 : vector<1x32xf32> to vector<8x32xf32>
    %13 = arith.mulf %10, %12 : vector<8x32xf32>
    %cst_11 = arith.constant dense<0.000000e+00> : vector<8xf32>
    %14 = vector.multi_reduction <add>, %13, %cst_11 [1] : vector<8x32xf32> to vector<8xf32>
    %15 = vector.shape_cast %14 : vector<8xf32> to vector<8x1xf32>
    %c0_12 = arith.constant 0 : index
    %c0_13 = arith.constant 0 : index
    %16 = memref.load %arg5[%c0_12, %c0_13] : memref<1x1xf32, #tpu.memory_space<smem>>
    %17 = vector.broadcast %16 : f32 to vector<8x1xf32>
    %18 = arith.addf %15, %17 : vector<8x1xf32>
    %19 = arith.negf %18 : vector<8x1xf32>
    %20 = math.exp %19 : vector<8x1xf32>
    %cst_14 = arith.constant 1.000000e+00 : f32
    %21 = vector.broadcast %cst_14 : f32 to vector<8x1xf32>
    %22 = arith.addf %21, %20 : vector<8x1xf32>
    %23 = arith.divf %21, %22 : vector<8x1xf32>
    %24 = vector.shape_cast %23 : vector<8x1xf32> to vector<8x1xf32>
    %25 = vector.broadcast %24 : vector<8x1xf32> to vector<8x128xf32>
    %c0_15 = arith.constant 0 : index
    %c0_16 = arith.constant 0 : index
    %26 = vector.load %arg6[%c0_15, %c0_16] : memref<8x128xf32, #tpu.memory_space<vmem>>, vector<8x128xf32>
    tpu.vector_store %arg6[%c0_15, %c0_16], %25 {strides = array<i32>} : memref<8x128xf32, #tpu.memory_space<vmem>>, vector<8x128xf32>,
    return
  }
  func.func @transform_0(%arg0: i32) -> (i32, i32, i32) {
    %c0_i32 = arith.constant 0 : i32
    %c0_i32_0 = arith.constant 0 : i32
    %c0_i32_1 = arith.constant 0 : i32
    return %arg0, %c0_i32, %c0_i32_0 : i32, i32, i32
  }
  func.func @transform_1(%arg0: i32) -> (i32, i32) {
    %c0_i32 = arith.constant 0 : i32
    %c0_i32_0 = arith.constant 0 : i32
    %c0_i32_1 = arith.constant 0 : i32
    return %c0_i32, %c0_i32_0 : i32, i32
  }
  func.func @transform_2(%arg0: i32) -> (i32, i32) {
    %c0_i32 = arith.constant 0 : i32
    %c0_i32_0 = arith.constant 0 : i32
    %c0_i32_1 = arith.constant 0 : i32
    return %c0_i32, %c0_i32_0 : i32, i32
  }
  func.func @transform_3(%arg0: i32) -> (i32, i32) {
    %c0_i32 = arith.constant 0 : i32
    %c0_i32_0 = arith.constant 0 : i32
    %c0_i32_1 = arith.constant 0 : i32
    return %c0_i32, %c0_i32_0 : i32, i32
  }
  func.func @transform_4(%arg0: i32) -> (i32, i32) {
    %c0_i32 = arith.constant 0 : i32
    %c0_i32_0 = arith.constant 0 : i32
    %c0_i32_1 = arith.constant 0 : i32
    return %c0_i32, %c0_i32_0 : i32, i32
  }
  func.func @transform_5(%arg0: i32) -> (i32, i32) {
    %c0_i32 = arith.constant 0 : i32
    %c0_i32_0 = arith.constant 0 : i32
    return %arg0, %c0_i32 : i32, i32
  }
}

</mosaic_0001>

<llo_original>
// kernel: tpu_custom_call.1
$region0: #{tpu_custom_call.1}
  #allocation0 [shape = 'u32[]', space=smem, size = 0x4, offset = 0x4, fixed_abs, tag = 'smem constant byte address 0x4 - core index']
  #allocation1 [shape = 'u32[144,128]{1,0:T(1,128)}', space=vmem, size = 0x12000, scoped, tag = 'internal scratch']
  #allocation2 [shape = 'f32[1,1]{1,0:T(1,128)S(6)}', space=smem, size = 0x200, scoped, tag = 'scoped memory for tpu_custom_call.1']
  %s0 = inlined_call_operand.vmem [shape: f32[8,4,128], index: 0, kind: input, shape index: {}]
  %s1 = inlined_call_operand.vmem [shape: f32[128,32], index: 1, kind: input, shape index: {}]
  %s2 = inlined_call_operand.vmem [shape: f32[1,32], index: 2, kind: input, shape index: {}]
  %s3 = inlined_call_operand.vmem [shape: f32[1,32], index: 3, kind: input, shape index: {}]
  %s4 = inlined_call_operand.<no memory space> [shape: f32[1,1], index: 4, kind: input, shape index: {}]
  %s5 = inlined_call_operand.hbm [shape: f32[8,128], index: 5, kind: output, shape index: {}]
  %s6 = sld [smem:[#allocation0]]
  $region30: #{tpu_custom_call.1} parent=0
    _
  %s8 = ssub.s32 1, %s6
  %s9 = scalar_select 0, %s8, %s6
  %10 = sst [smem:[#allocation2]] %s4
  $region1: #{tpu_custom_call.1} parent=0
    #allocation3 [shape = 'u8[4096]{0}', space=vmem, size = 0x1000, scoped, tag = 'output window, operand 0, single buffered']
    #allocation4 [shape = 's32[1]{0}', space=sflag, size = 0x4, scoped, tag = 'scoped memory for tpu_custom_call.1']
    %11 = vsyncpa [#allocation4], 0
    // Predicated region
    $region2: #{tpu_custom_call.1} parent=1 // pred_check
      _
    $region3: #{tpu_custom_call.1} parent=1 // pred_check_branch
      %13 = sbr.rel (0) target = $region5
    $region4: #{tpu_custom_call.1} parent=1 // pred_region
      _
    $region5: #{tpu_custom_call.1} parent=1 // pred_fallthru
      _
    // Predicated region
    $region6: #{tpu_custom_call.1} parent=1 // pred_check
      _
    $region7: #{tpu_custom_call.1} parent=1 // pred_check_branch
      %15 = sbr.rel (0) target = $region9
    $region8: #{tpu_custom_call.1} parent=1 // pred_region
      _
    $region9: #{tpu_custom_call.1} parent=1 // pred_fallthru
      _
    // Predicated region
    $region10: #{tpu_custom_call.1} parent=1 // pred_check
      _
    $region11: #{tpu_custom_call.1} parent=1 // pred_check_branch
      %17 = sbr.rel (0) target = $region13
    $region12: #{tpu_custom_call.1} parent=1 // pred_region
      _
    $region13: #{tpu_custom_call.1} parent=1 // pred_fallthru
      _
    // Predicated region
    $region14: #{tpu_custom_call.1} parent=1 // pred_check
      _
    $region15: #{tpu_custom_call.1} parent=1 // pred_check_branch
      %19 = sbr.rel (0) target = $region17
    $region16: #{tpu_custom_call.1} parent=1 // pred_region
      _
    $region17: #{tpu_custom_call.1} parent=1 // pred_fallthru
      _
    // Predicated region
    $region18: #{tpu_custom_call.1} parent=1 // pred_check
      _
    $region19: #{tpu_custom_call.1} parent=1 // pred_check_branch
      %21 = sbr.rel (0) target = $region21
    $region20: #{tpu_custom_call.1} parent=1 // pred_region
      _
    $region21: #{tpu_custom_call.1} parent=1 // pred_fallthru
      _
    %v22 = vld [vmem:[%s0] sm:$0xf]
    %v23 = vld [vmem:[%s0 + $0x4] sm:$0xf]
    %v24 = vld [vmem:[%s0 + $0x8] sm:$0xf]
    %v25 = vld [vmem:[%s0 + $0xc] sm:$0xf]
    %v26 = vld [vmem:[%s0 + $0x10] sm:$0xf]
    %v27 = vld [vmem:[%s0 + $0x14] sm:$0xf]
    %v28 = vld [vmem:[%s0 + $0x18] sm:$0xf]
    %v29 = vld [vmem:[%s0 + $0x1c] sm:$0xf]
    %vm30 = vcmask 1043456
    %v31 = vsel %vm30, %v22, 0.0
    %v32 = vrot.slane %v31, 4
    %v33 = vadd.f32 %v31, %v32
    %v34 = vrot.slane %v33, 2
    %v35 = vadd.f32 %v33, %v34
    %v36 = vrot.slane %v35, 1
    %v37 = vadd.f32 %v35, %v36
    %v38 = vsel %vm30, %v23, 0.0
    %v39 = vrot.slane %v38, 4
    %v40 = vadd.f32 %v38, %v39
    %v41 = vrot.slane %v40, 2
    %v42 = vadd.f32 %v40, %v41
    %v43 = vrot.slane %v42, 1
    %v44 = vadd.f32 %v42, %v43
    %v45 = vsel %vm30, %v24, 0.0
    %v46 = vrot.slane %v45, 4
    %v47 = vadd.f32 %v45, %v46
    %v48 = vrot.slane %v47, 2
    %v49 = vadd.f32 %v47, %v48
    %v50 = vrot.slane %v49, 1
    %v51 = vadd.f32 %v49, %v50
    %v52 = vsel %vm30, %v25, 0.0
    %v53 = vrot.slane %v52, 4
    %v54 = vadd.f32 %v52, %v53
    %v55 = vrot.slane %v54, 2
    %v56 = vadd.f32 %v54, %v55
    %v57 = vrot.slane %v56, 1
    %v58 = vadd.f32 %v56, %v57
    %v59 = vsel %vm30, %v26, 0.0
    %v60 = vrot.slane %v59, 4
    %v61 = vadd.f32 %v59, %v60
    %v62 = vrot.slane %v61, 2
    %v63 = vadd.f32 %v61, %v62
    %v64 = vrot.slane %v63, 1
    %v65 = vadd.f32 %v63, %v64
    %v66 = vsel %vm30, %v27, 0.0
    %v67 = vrot.slane %v66, 4
    %v68 = vadd.f32 %v66, %v67
    %v69 = vrot.slane %v68, 2
    %v70 = vadd.f32 %v68, %v69
    %v71 = vrot.slane %v70, 1
    %v72 = vadd.f32 %v70, %v71
    %v73 = vsel %vm30, %v28, 0.0
    %v74 = vrot.slane %v73, 4
    %v75 = vadd.f32 %v73, %v74
    %v76 = vrot.slane %v75, 2
    %v77 = vadd.f32 %v75, %v76
    %v78 = vrot.slane %v77, 1
    %v79 = vadd.f32 %v77, %v78
    %v80 = vsel %vm30, %v29, 0.0
    %v81 = vrot.slane %v80, 4
    %v82 = vadd.f32 %v80, %v81
    %v83 = vrot.slane %v82, 2
    %v84 = vadd.f32 %v82, %v83
    %v85 = vrot.slane %v84, 1
    %v86 = vadd.f32 %v84, %v85
    %v87 = vld [vmem:[%s1] sm:$0xff]
    %v88 = vld [vmem:[%s1 + $0x8] sm:$0xff]
    %v89 = vld [vmem:[%s1 + $0x10] sm:$0xff]
    %v90 = vld [vmem:[%s1 + $0x18] sm:$0xff]
    %v91 = vld [vmem:[%s1 + $0x20] sm:$0xff]
    %v92 = vld [vmem:[%s1 + $0x28] sm:$0xff]
    %v93 = vld [vmem:[%s1 + $0x30] sm:$0xff]
    %v94 = vld [vmem:[%s1 + $0x38] sm:$0xff]
    %v95 = vld [vmem:[%s1 + $0x40] sm:$0xff]
    %v96 = vld [vmem:[%s1 + $0x48] sm:$0xff]
    %v97 = vld [vmem:[%s1 + $0x50] sm:$0xff]
    %v98 = vld [vmem:[%s1 + $0x58] sm:$0xff]
    %v99 = vld [vmem:[%s1 + $0x60] sm:$0xff]
    %v100 = vld [vmem:[%s1 + $0x68] sm:$0xff]
    %v101 = vld [vmem:[%s1 + $0x70] sm:$0xff]
    %v102 = vld [vmem:[%s1 + $0x78] sm:$0xff]
    %vm111 = vcmask 1041409
    %v112 = vsel %vm111, %v44, %v37
    %vm113 = vcmask 1042434
    %v114 = vsel %vm113, %v51, %v112
    %vm115 = vcmask 1043459
    %v116 = vsel %vm115, %v58, %v114
    %vm117 = vcmask 1044484
    %v118 = vsel %vm117, %v65, %v116
    %vm119 = vcmask 1045509
    %v120 = vsel %vm119, %v72, %v118
    %vm121 = vcmask 1046534
    %v122 = vsel %vm121, %v79, %v120
    %vm123 = vcmask 1047559
    %v124 = vsel %vm123, %v86, %v122
    %126 = vmatprep.subr.mxu0 0.0
    %127 = vmatpush1.msra.mxu0 %v87
    %128 = vmatprep.subr.mxu0 0.0
    %129 = vmatpush1.msra.mxu0 %v88
    %130 = vmatprep.subr.mxu0 0.0
    %131 = vmatpush1.msra.mxu0 %v89
    %132 = vmatprep.subr.mxu0 0.0
    %133 = vmatpush1.msra.mxu0 %v90
    %134 = vmatprep.subr.mxu0 0.0
    %135 = vmatpush1.msra.mxu0 %v91
    %136 = vmatprep.subr.mxu0 0.0
    %137 = vmatpush1.msra.mxu0 %v92
    %138 = vmatprep.subr.mxu0 0.0
    %139 = vmatpush1.msra.mxu0 %v93
    %140 = vmatprep.subr.mxu0 0.0
    %141 = vmatpush1.msra.mxu0 %v94
    %142 = vmatprep.subr.mxu0 0.0
    %143 = vmatpush1.msra.mxu0 %v95
    %144 = vmatprep.subr.mxu0 0.0
    %145 = vmatpush1.msra.mxu0 %v96
    %146 = vmatprep.subr.mxu0 0.0
    %147 = vmatpush1.msra.mxu0 %v97
    %148 = vmatprep.subr.mxu0 0.0
    %149 = vmatpush1.msra.mxu0 %v98
    %150 = vmatprep.subr.mxu0 0.0
    %151 = vmatpush1.msra.mxu0 %v99
    %152 = vmatprep.subr.mxu0 0.0
    %153 = vmatpush1.msra.mxu0 %v100
    %154 = vmatprep.subr.mxu0 0.0
    %155 = vmatpush1.msra.mxu0 %v101
    %156 = vmatprep.subr.mxu0 0.0
    %157 = vmatpush1.msra.mxu0 %v102
    %158 = vmatprep.subr.mxu0 0.0
    %159 = vmatpush1.msra.mxu0 0.0
    %160 = vmatprep.subr.mxu0 0.0
    %161 = vmatpush1.msra.mxu0 0.0
    %162 = vmatprep.subr.mxu0 0.0
    %163 = vmatpush1.msra.mxu0 0.0
    %164 = vmatprep.subr.mxu0 0.0
    %165 = vmatpush1.msra.mxu0 0.0
    %166 = vmatprep.subr.mxu0 0.0
    %167 = vmatpush1.msra.mxu0 0.0
    %168 = vmatprep.subr.mxu0 0.0
    %169 = vmatpush1.msra.mxu0 0.0
    %170 = vmatprep.subr.mxu0 0.0
    %171 = vmatpush1.msra.mxu0 0.0
    %172 = vmatprep.subr.mxu0 0.0
    %173 = vmatpush1.msra.mxu0 0.0
    %174 = vmatprep.subr.mxu0 0.0
    %175 = vmatpush1.msra.mxu0 0.0
    %176 = vmatprep.subr.mxu0 0.0
    %177 = vmatpush1.msra.mxu0 0.0
    %178 = vmatprep.subr.mxu0 0.0
    %179 = vmatpush1.msra.mxu0 0.0
    %180 = vmatprep.subr.mxu0 0.0
    %181 = vmatpush1.msra.mxu0 0.0
    %182 = vmatprep.subr.mxu0 0.0
    %183 = vmatpush1.msra.mxu0 0.0
    %184 = vmatprep.subr.mxu0 0.0
    %185 = vmatpush1.msra.mxu0 0.0
    %186 = vmatprep.subr.mxu0 0.0
    %187 = vmatpush1.msra.mxu0 0.0
    %188 = vmatprep.subr.mxu0 0.0
    %189 = vmatpush1.msra.mxu0 0.0
    %190 = vmatprep.mubr.f32.mxu0 0.0
    %191 = vmatmul.mubr.f32.gmra.mrb[0].mxu0 %v124
    %v192 = vpop.f32.mrb[0].mxu0
    %v193 = vadd.f32 0.0, %v192
    %v194 = vpop.f32.mrb[0].mxu0
    %195 = vdwg.mxu0
    %v196 = vmul.f32 %v193, 0.125
    %v197 = vld [vmem:[%s2] sm:$0x1]
    %v199 = vlaneseq
    %v200 = vshrl.u32 %v199, 7
    %v201 = vsub.s32 0, %v200
    %v202 = vrot.slane %v197, %v201
    %v204 = vadd.f32 %v196, %v202
    %v205 = vmax.f32 %v204, 0.0
    %v206 = vld [vmem:[%s3] sm:$0x1]
    %v208 = vlaneseq
    %v209 = vshrl.u32 %v208, 7
    %v210 = vsub.s32 0, %v209
    %v211 = vrot.slane %v206, %v210
    %v213 = vmul.f32 %v205, %v211
    %vm214 = vcmask 261120
    %v215 = vsel %vm214, %v213, 0.0
    %216 = vadd.xlane.f32.xlu0 %v215
    %v217 = vpop.xlane.xlu0 %216
    %s218 = sld [smem:[#allocation2]]
    %v219 = vstv %s218
    %v220 = vadd.f32 %v217, %v219
    %v221 = vxor.u32 %v220, 2147483648
    %v222 = vmul.f32 %v221, 1.442695
    %v223 = vpow.pop %v222
    %v224 = vadd.f32 %v223, 1.0
    %v225 = vrcp.pop %v224
    %v226 = vmul.f32 1.0, %v225
    %227 = vst [vmem:[#allocation3] sm:$0xff] %v226
    // Predicated region
    $region22: #{tpu_custom_call.1} parent=1 // pred_check
      _
    $region23: #{tpu_custom_call.1} parent=1 // pred_check_branch
      %229 = sbr.rel (0) target = $region25
    $region24: #{tpu_custom_call.1} parent=1 // pred_region
      %s231 = ssub.s32 128, 128
      %232 = vsyncadd [#allocation4], %s231
      %s234 = sshll.u32 [#allocation3], 4
      %s235 = int_to_ptr.vmem [resolvable:$true] %s234
      %237 = dma.vmem_to_hbm [thread:$0]  %s235, 128, %s5, [#allocation4]
    $region25: #{tpu_custom_call.1} parent=1 // pred_fallthru
      _
    // Predicated region
    $region26: #{tpu_custom_call.1} parent=1 // pred_check
      _
    $region27: #{tpu_custom_call.1} parent=1 // pred_check_branch
      %239 = sbr.rel (0) target = $region29
    $region28: #{tpu_custom_call.1} parent=1 // pred_region
      %240 = dma.done [#allocation4], 128
    $region29: #{tpu_custom_call.1} parent=1 // pred_fallthru
      _
    %241 = vsyncpa [#allocation4], 1

</llo_original>
